<compile_context>
chip_gen: v7x
topology: tpu7x:2x2x1
jax: 0.10.0
libtpu: 0.0.40
codegen_flags: <defaults>
</compile_context>

<pallas_src>
import math
import functools

import jax
import jax.numpy as jnp
from jax.experimental import pallas as pl
from jax.experimental.pallas import tpu as pltpu


def _round_up(x, m):
    return ((x + m - 1) // m) * m


def _largest_tile(padded_dim, unit, cap):
    """Largest multiple of `unit` that divides `padded_dim` and is <= cap."""
    best = unit
    t = unit
    while t <= min(cap, padded_dim):
        if padded_dim % t == 0:
            best = t
        t += unit
    return best


def _forget_gate_kernel(x_ref, w_ref, b_ref, o_ref, acc_ref):
    # x: (tm, tk) bf16   w: (tk, tn) bf16   b: (1, tn) f32
    # o: (tm, tn) f32    acc: (tm, tn) f32 scratch (resident across K steps)
    k = pl.program_id(2)

    @pl.when(k == 0)
    def _init():
        acc_ref[...] = jnp.zeros_like(acc_ref)

    acc_ref[...] += jnp.dot(
        x_ref[...], w_ref[...], preferred_element_type=jnp.float32
    )

    @pl.when(k == pl.num_programs(2) - 1)
    def _finalize():
        z = acc_ref[...] + b_ref[...]                       # f32 epilogue (v5e-safe)
        e = jnp.exp(-z)                                     # EUP
        # TODO(synk): flip approx=True if profiling ever shows this divide binding the VPU.
        o_ref[...] = pl.reciprocal(1.0 + e, approx=False).astype(o_ref.dtype)


@functools.partial(jax.jit, static_argnames=("out_size",))
def _forget_gate_rows_impl(x_rows, w_t, b_row, *, out_size):
    """sigmoid(x_rows @ W^T + b) with x_rows: (B, in_size), lane-dense output."""
    B, in_size = x_rows.shape
    k_pad, n_pad = w_t.shape                 # weights already padded to x128 at init

    # Pad activations: batch to the bf16 sublane pack (16), K up to the padded weight K.
    b_pad = _round_up(B, 16)
    x = x_rows.astype(jnp.bfloat16)
    x = jnp.pad(x, ((0, b_pad - B), (0, k_pad - in_size)))

    # Tile sizes capped for v7x's 64 MiB physical VMEM (a few MiB total with
    # double-buffering); v6e-friendly 256-deep+ K tiles when shapes allow.
    tm = _largest_tile(b_pad, 16, 256)
    tn = _largest_tile(n_pad, 128, 512)
    tk = _largest_tile(k_pad, 128, 512)
    grid = (b_pad // tm, n_pad // tn, k_pad // tk)

    cost = pl.CostEstimate(
        flops=2 * b_pad * k_pad * n_pad,
        transcendentals=2 * b_pad * n_pad,   # exp + reciprocal per output element
        bytes_accessed=2 * (b_pad * k_pad + k_pad * n_pad)   # bf16 inputs
        + 4 * (n_pad + b_pad * n_pad),                        # f32 bias + output
    )

    out_padded = pl.pallas_call(
        _forget_gate_kernel,
        out_shape=jax.ShapeDtypeStruct((b_pad, n_pad), jnp.float32),
        grid_spec=pltpu.PrefetchScalarGridSpec(
            num_scalar_prefetch=0,
            grid=grid,
            in_specs=[
                pl.BlockSpec((tm, tk), lambda i, j, k: (i, k)),   # x tile
                pl.BlockSpec((tk, tn), lambda i, j, k: (k, j)),   # W tile
                pl.BlockSpec((1, tn), lambda i, j, k: (0, j)),    # bias row
            ],
            out_specs=pl.BlockSpec((tm, tn), lambda i, j, k: (i, j)),
            scratch_shapes=[pltpu.VMEM((tm, tn), jnp.float32)],
        ),
        compiler_params=pltpu.CompilerParams(
            dimension_semantics=("parallel", "parallel", "arbitrary"),
            vmem_limit_bytes=32 * 1024 * 1024,
        ),
        cost_estimate=cost,
    )(x, w_t, b_row)

    return out_padded[:B, :out_size]


def forget_gate_forward_rows(x_rows, params):
    """Row-major entry point: x_rows (B, in_size) -> (B, out_size)."""
    return _forget_gate_rows_impl(
        x_rows,
        params["W_linear_T"],
        params["b_linear_row"],
        out_size=params["out_size"],
    )


def forget_gate_forward(x_col, params):
    """Module-fidelity entry point using the file's column-vector convention.

    x_col: (in_size, B) -> (out_size, B). For B == 1 the layout plumbing is a
    free reshape; for B > 1 prefer forget_gate_forward_rows directly.
    """
    in_size, b = x_col.shape
    if b == 1:
        x_rows = x_col.reshape(1, in_size)
        out_rows = forget_gate_forward_rows(x_rows, params)
        return out_rows.reshape(params["out_size"], 1)
    out_rows = forget_gate_forward_rows(x_col.T, params)
    return out_rows.T


def init_forget_gate_params(key, in_size, forget_gate_hidden_size, out_size):
    """Mirror the module's three LinearLayers (uniform(-1/sqrt(fan_in), +)).

    Forward-path weights are stored pre-transposed, zero-padded to (x128, x128),
    and cast to bf16 once at init (MXU-ready, lane-dense). hidden_layer/out_layer
    are defined by the module but never used by forward().
    """
    ks = jax.random.split(key, 6)

    def uni(k, shape, fan_in):
        s = 1.0 / math.sqrt(fan_in)
        return jax.random.uniform(k, shape, dtype=jnp.float32, minval=-s, maxval=s)

    k_pad = _round_up(in_size, 128)
    n_pad = _round_up(out_size, 128)

    w_t = uni(ks[0], (in_size, out_size), in_size)     # = W_linear.T
    b_row = uni(ks[1], (1, out_size), in_size)         # = b_linear.T

    w_t_padded = (
        jnp.zeros((k_pad, n_pad), jnp.bfloat16)
        .at[:in_size, :out_size]
        .set(w_t.astype(jnp.bfloat16))
    )
    b_row_padded = jnp.zeros((1, n_pad), jnp.float32).at[:, :out_size].set(b_row)

    params = {
        # forward-path layer, padded + lane-dense + bf16
        "W_linear_T": w_t_padded,
        "b_linear_row": b_row_padded,
        "in_size": in_size,
        "out_size": out_size,
        # unused-in-forward layers (module defines them; forward ignores them)
        "W_hidden": uni(ks[2], (forget_gate_hidden_size, in_size), in_size),
        "b_hidden": uni(ks[3], (forget_gate_hidden_size, 1), in_size),
        "W_out": uni(ks[4], (out_size, forget_gate_hidden_size), forget_gate_hidden_size),
        "b_out": uni(ks[5], (out_size, 1), forget_gate_hidden_size),
    }
    return params


def _reference_forward_rows(x_rows, params):
    """Pure-JAX reference with the same bf16 weight/activation casts."""
    in_size, out_size = params["in_size"], params["out_size"]
    w = params["W_linear_T"][:in_size, :out_size].astype(jnp.float32)
    b = params["b_linear_row"][:, :out_size]
    x = x_rows.astype(jnp.bfloat16).astype(jnp.float32)
    return jax.nn.sigmoid(x @ w + b)


if __name__ == "__main__":
    in_size = 64
    forget_gate_hidden_size = 48
    out_size = 128
    batch = 16  # fills the bf16 sublane pack; review: amortize by batching rows

    key = jax.random.PRNGKey(0)
    k_params, k_x = jax.random.split(key, 2)

    params = init_forget_gate_params(k_params, in_size, forget_gate_hidden_size, out_size)
    x_rows = jax.random.normal(k_x, (batch, in_size), dtype=jnp.float32)

    # Row-major batched path (primary).
    out = forget_gate_forward_rows(x_rows, params)
    jax.block_until_ready(out)
    ref = _reference_forward_rows(x_rows, params)
    assert out.shape == (batch, out_size)
    assert jnp.allclose(out, ref, atol=1e-4, rtol=1e-4)

    # Module-fidelity column-vector path (B == 1, free reshapes).
    x_col = x_rows[:1].T  # (in_size, 1)
    out_col = forget_gate_forward(x_col, params)
    jax.block_until_ready(out_col)
    assert out_col.shape == (out_size, 1)
    assert jnp.allclose(out_col[:, 0], ref[0], atol=1e-4, rtol=1e-4)

    print("KERNEL_OK")
</pallas_src>

<mosaic_0001>
module attributes {stable_mosaic.version = 11 : i64} {
  func.func @_forget_gate_kernel(%arg0: i32, %arg1: i32, %arg2: i32, %arg3: memref<16x128xbf16, #tpu.memory_space<vmem>>, %arg4: memref<128x128xbf16, #tpu.memory_space<vmem>>, %arg5: memref<1x128xf32, #tpu.memory_space<vmem>>, %arg6: memref<16x128xf32, #tpu.memory_space<vmem>>, %arg7: memref<16x128xf32, #tpu.memory_space<vmem>>) attributes {dimension_semantics = [#tpu.dimension_semantics<parallel>, #tpu.dimension_semantics<parallel>, #tpu.dimension_semantics<arbitrary>], iteration_bounds = array<i64: 1, 1, 1>, scalar_prefetch = 0 : i64, scratch_operands = 1 : i64, tpu.core_type = #tpu.core_type<tc>, window_params = [{transform_indices = @transform_0, window_bounds = array<i64: 16, 128>}, {transform_indices = @transform_1, window_bounds = array<i64: 128, 128>}, {transform_indices = @transform_2, window_bounds = array<i64: 1, 128>}, {transform_indices = @transform_3, window_bounds = array<i64: 16, 128>}]} {
    %c0_i32 = arith.constant 0 : i32
    %0 = arith.cmpi eq, %arg2, %c0_i32 : i32
    %1 = arith.extui %0 : i1 to i32
    %c0_i32_0 = arith.constant 0 : i32
    %2 = arith.cmpi ne, %1, %c0_i32_0 : i32
    scf.if %2 {
      %cst_10 = arith.constant 0.000000e+00 : f32
      %12 = vector.broadcast %cst_10 : f32 to vector<16x128xf32>
      %c0_11 = arith.constant 0 : index
      %c0_12 = arith.constant 0 : index
      %13 = vector.load %arg7[%c0_11, %c0_12] : memref<16x128xf32, #tpu.memory_space<vmem>>, vector<16x128xf32>
      tpu.vector_store %arg7[%c0_11, %c0_12], %12 {strides = array<i32>} : memref<16x128xf32, #tpu.memory_space<vmem>>, vector<16x128xf32>,
    } else {
    }
    %c0 = arith.constant 0 : index
    %c0_1 = arith.constant 0 : index
    %3 = vector.load %arg7[%c0, %c0_1] : memref<16x128xf32, #tpu.memory_space<vmem>>, vector<16x128xf32>
    %c0_2 = arith.constant 0 : index
    %c0_3 = arith.constant 0 : index
    %4 = vector.load %arg3[%c0_2, %c0_3] : memref<16x128xbf16, #tpu.memory_space<vmem>>, vector<16x128xbf16>
    %c0_4 = arith.constant 0 : index
    %c0_5 = arith.constant 0 : index
    %5 = vector.load %arg4[%c0_4, %c0_5] : memref<128x128xbf16, #tpu.memory_space<vmem>>, vector<128x128xbf16>
    %cst = arith.constant dense<0.000000e+00> : vector<16x128xf32>
    %6 = tpu.matmul %4, %5, %cst {dimension_numbers = #tpu.dot_dimension_numbers<[1], [0], [0], [1], [0, 0, 1, 1], [], []>} : vector<16x128xbf16>, vector<128x128xbf16>, vector<16x128xf32> -> vector<16x128xf32>
    %7 = arith.addf %3, %6 : vector<16x128xf32>
    %c0_6 = arith.constant 0 : index
    %c0_7 = arith.constant 0 : index
    %8 = vector.load %arg7[%c0_6, %c0_7] : memref<16x128xf32, #tpu.memory_space<vmem>>, vector<16x128xf32>
    tpu.vector_store %arg7[%c0_6, %c0_7], %7 {strides = array<i32>} : memref<16x128xf32, #tpu.memory_space<vmem>>, vector<16x128xf32>,
    %c0_i32_8 = arith.constant 0 : i32
    %9 = arith.cmpi eq, %arg2, %c0_i32_8 : i32
    %10 = arith.extui %9 : i1 to i32
    %c0_i32_9 = arith.constant 0 : i32
    %11 = arith.cmpi ne, %10, %c0_i32_9 : i32
    scf.if %11 {
      %c0_10 = arith.constant 0 : index
      %c0_11 = arith.constant 0 : index
      %12 = vector.load %arg7[%c0_10, %c0_11] : memref<16x128xf32, #tpu.memory_space<vmem>>, vector<16x128xf32>
      %c0_12 = arith.constant 0 : index
      %c0_13 = arith.constant 0 : index
      %13 = vector.load %arg5[%c0_12, %c0_13] : memref<1x128xf32, #tpu.memory_space<vmem>>, vector<1x128xf32>
      %14 = vector.broadcast %13 : vector<1x128xf32> to vector<16x128xf32>
      %15 = arith.addf %12, %14 : vector<16x128xf32>
      %cst_14 = arith.constant 0.000000e+00 : f32
      %16 = vector.broadcast %cst_14 : f32 to vector<16x128xf32>
      %17 = arith.subf %16, %15 : vector<16x128xf32>
      %18 = math.exp %17 : vector<16x128xf32>
      %cst_15 = arith.constant 1.000000e+00 : f32
      %19 = vector.broadcast %cst_15 : f32 to vector<16x128xf32>
      %20 = arith.addf %19, %18 : vector<16x128xf32>
      %21 = tpu.reciprocal %20 : vector<16x128xf32> -> vector<16x128xf32>
      %c0_16 = arith.constant 0 : index
      %c0_17 = arith.constant 0 : index
      %22 = vector.load %arg6[%c0_16, %c0_17] : memref<16x128xf32, #tpu.memory_space<vmem>>, vector<16x128xf32>
      tpu.vector_store %arg6[%c0_16, %c0_17], %21 {strides = array<i32>} : memref<16x128xf32, #tpu.memory_space<vmem>>, vector<16x128xf32>,
    } else {
    }
    return
  }
  func.func @transform_0(%arg0: i32, %arg1: i32, %arg2: i32) -> (i32, i32) {
    %c0_i32 = arith.constant 0 : i32
    return %arg0, %arg2 : i32, i32
  }
  func.func @transform_1(%arg0: i32, %arg1: i32, %arg2: i32) -> (i32, i32) {
    %c0_i32 = arith.constant 0 : i32
    return %arg2, %arg1 : i32, i32
  }
  func.func @transform_2(%arg0: i32, %arg1: i32, %arg2: i32) -> (i32, i32) {
    %c0_i32 = arith.constant 0 : i32
    %c0_i32_0 = arith.constant 0 : i32
    return %c0_i32, %arg1 : i32, i32
  }
  func.func @transform_3(%arg0: i32, %arg1: i32, %arg2: i32) -> (i32, i32) {
    %c0_i32 = arith.constant 0 : i32
    return %arg0, %arg1 : i32, i32
  }
}

</mosaic_0001>

<llo_original>
// kernel: _forget_gate_rows_impl.1
$region0: #{_forget_gate_rows_impl.1}
  #allocation0 [shape = 'u32[]', space=smem, size = 0x4, offset = 0x4, fixed_abs, tag = 'smem constant byte address 0x4 - core index']
  #allocation1 [shape = 'u32[144,128]{1,0:T(1,128)}', space=vmem, size = 0x12000, scoped, tag = 'internal scratch']
  #allocation2 [shape = 'f32[16,128]{1,0:T(8,128)}', space=vmem, size = 0x2000, scoped, tag = 'scratch operand']
  %s0 = inlined_call_operand.vmem [shape: bf16[16,128], index: 0, kind: input, shape index: {}]
  %s1 = inlined_call_operand.hbm [shape: bf16[128,128], index: 1, kind: input, shape index: {}]
  %s2 = inlined_call_operand.vmem [shape: f32[1,128], index: 2, kind: input, shape index: {}]
  %s3 = inlined_call_operand.hbm [shape: f32[16,128], index: 3, kind: output, shape index: {}]
  %s4 = sld [smem:[#allocation0]]
  $region34: #{_forget_gate_rows_impl.1} parent=0
    _
  %s6 = ssub.s32 1, %s4
  %s7 = scalar_select 0, %s6, %s4
  $region1: #{_forget_gate_rows_impl.1} parent=0
    #allocation3 [shape = 'u8[32768]{0}', space=vmem, size = 0x8000, scoped, tag = 'input window, operand 1, single buffered']
    #allocation4 [shape = 's32[1]{0}', space=sflag, size = 0x4, scoped, tag = 'scoped memory for _forget_gate_rows_impl.1']
    #allocation5 [shape = 's32[1]{0}', space=sflag, size = 0x4, scoped, tag = 'scoped memory for _forget_gate_rows_impl.1']
    #allocation6 [shape = 'u8[8192]{0}', space=vmem, size = 0x2000, scoped, tag = 'output window, operand 0, single buffered']
    %8 = vsyncpa [#allocation4], 0
    %9 = vsyncpa [#allocation5], 0
    // Predicated region
    $region2: #{_forget_gate_rows_impl.1} parent=1 // pred_check
      _
    $region3: #{_forget_gate_rows_impl.1} parent=1 // pred_check_branch
      %11 = sbr.rel (0) target = $region5
    $region4: #{_forget_gate_rows_impl.1} parent=1 // pred_region
      _
    $region5: #{_forget_gate_rows_impl.1} parent=1 // pred_fallthru
      _
    // Predicated region
    $region6: #{_forget_gate_rows_impl.1} parent=1 // pred_check
      _
    $region7: #{_forget_gate_rows_impl.1} parent=1 // pred_check_branch
      %13 = sbr.rel (0) target = $region9
    $region8: #{_forget_gate_rows_impl.1} parent=1 // pred_region
      %s15 = ssub.s32 1024, 1024
      %16 = vsyncadd [#allocation4], %s15
      %s17 = sshll.u32 [#allocation3], 4
      %s18 = int_to_ptr.vmem [resolvable:$true] %s17
      %23 = dma.hbm_to_vmem [thread:$0]  %s1, 1024, %s18, [#allocation4], 64, 64, 4
    $region9: #{_forget_gate_rows_impl.1} parent=1 // pred_fallthru
      _
    // Predicated region
    $region10: #{_forget_gate_rows_impl.1} parent=1 // pred_check
      _
    $region11: #{_forget_gate_rows_impl.1} parent=1 // pred_check_branch
      %25 = sbr.rel (0) target = $region13
    $region12: #{_forget_gate_rows_impl.1} parent=1 // pred_region
      _
    $region13: #{_forget_gate_rows_impl.1} parent=1 // pred_fallthru
      _
    // Predicated region
    $region14: #{_forget_gate_rows_impl.1} parent=1 // pred_check
      _
    $region15: #{_forget_gate_rows_impl.1} parent=1 // pred_check_branch
      %27 = sbr.rel (0) target = $region17
    $region16: #{_forget_gate_rows_impl.1} parent=1 // pred_region
      %28 = dma.done [#allocation4], 1024
    $region17: #{_forget_gate_rows_impl.1} parent=1 // pred_fallthru
      _
    %p30 = scmp.eq.s32.totalorder 0, 0
    // Predicated region
    $region18: #{_forget_gate_rows_impl.1} parent=1 // pred_check
      %p31 = pneg %p30
    $region19: #{_forget_gate_rows_impl.1} parent=1 // pred_check_branch
      %33 = sbr.rel (%p31) target = $region21
    $region20: #{_forget_gate_rows_impl.1} parent=1 // pred_region
      %34 = vst [vmem:[#allocation2] sm:$0xff] 0.0
      %35 = vst [vmem:[#allocation2 + $0x8] sm:$0xff] 0.0
    $region21: #{_forget_gate_rows_impl.1} parent=1 // pred_fallthru
      _
    %v36 = vld [vmem:[#allocation2] sm:$0xff]
    %v37 = vld [vmem:[#allocation2 + $0x8] sm:$0xff]
    %v38 = vld [vmem:[%s0] sm:$0xf]
    %v39 = vld [vmem:[%s0 + $0x4] sm:$0xf]
    %v40 = vld [vmem:[#allocation3] sm:$0xf]
    %v41 = vld [vmem:[#allocation3 + $0x4] sm:$0xf]
    %v42 = vld [vmem:[#allocation3 + $0x8] sm:$0xf]
    %v43 = vld [vmem:[#allocation3 + $0xc] sm:$0xf]
    %v44 = vld [vmem:[#allocation3 + $0x10] sm:$0xf]
    %v45 = vld [vmem:[#allocation3 + $0x14] sm:$0xf]
    %v46 = vld [vmem:[#allocation3 + $0x18] sm:$0xf]
    %v47 = vld [vmem:[#allocation3 + $0x1c] sm:$0xf]
    %v48 = vld [vmem:[#allocation3 + $0x20] sm:$0xf]
    %v49 = vld [vmem:[#allocation3 + $0x24] sm:$0xf]
    %v50 = vld [vmem:[#allocation3 + $0x28] sm:$0xf]
    %v51 = vld [vmem:[#allocation3 + $0x2c] sm:$0xf]
    %v52 = vld [vmem:[#allocation3 + $0x30] sm:$0xf]
    %v53 = vld [vmem:[#allocation3 + $0x34] sm:$0xf]
    %v54 = vld [vmem:[#allocation3 + $0x38] sm:$0xf]
    %v55 = vld [vmem:[#allocation3 + $0x3c] sm:$0xf]
    %v58 = vunpack.c.l.b16 %v38
    %v59 = vunpack.c.l.b16 %v39
    %v60 = vpack.c.b16 %v59, %v58
    %v78 = vunpack.c.l.b16 %v40
    %v79 = vunpack.c.l.b16 %v41
    %v80 = vunpack.c.l.b16 %v42
    %v81 = vunpack.c.l.b16 %v43
    %v82 = vunpack.c.l.b16 %v44
    %v83 = vunpack.c.l.b16 %v45
    %v84 = vunpack.c.l.b16 %v46
    %v85 = vunpack.c.l.b16 %v47
    %v86 = vunpack.c.l.b16 %v48
    %v87 = vunpack.c.l.b16 %v49
    %v88 = vunpack.c.l.b16 %v50
    %v89 = vunpack.c.l.b16 %v51
    %v90 = vunpack.c.l.b16 %v52
    %v91 = vunpack.c.l.b16 %v53
    %v92 = vunpack.c.l.b16 %v54
    %v93 = vunpack.c.l.b16 %v55
    %v94 = vpack.c.b16 %v79, %v78
    %v95 = vpack.c.b16 %v81, %v80
    %v96 = vpack.c.b16 %v83, %v82
    %v97 = vpack.c.b16 %v85, %v84
    %v98 = vpack.c.b16 %v87, %v86
    %v99 = vpack.c.b16 %v89, %v88
    %v100 = vpack.c.b16 %v91, %v90
    %v101 = vpack.c.b16 %v93, %v92
    %110 = vmatprep.subr.bf16.mxu0 0
    %111 = vmatpush1.bf16.msra.mxu0 %v94
    %112 = vmatprep.subr.bf16.mxu0 0
    %113 = vmatpush1.bf16.msra.mxu0 %v95
    %114 = vmatprep.subr.bf16.mxu0 0
    %115 = vmatpush1.bf16.msra.mxu0 %v96
    %116 = vmatprep.subr.bf16.mxu0 0
    %117 = vmatpush1.bf16.msra.mxu0 %v97
    %118 = vmatprep.subr.bf16.mxu0 0
    %119 = vmatpush1.bf16.msra.mxu0 %v98
    %120 = vmatprep.subr.bf16.mxu0 0
    %121 = vmatpush1.bf16.msra.mxu0 %v99
    %122 = vmatprep.subr.bf16.mxu0 0
    %123 = vmatpush1.bf16.msra.mxu0 %v100
    %124 = vmatprep.subr.bf16.mxu0 0
    %125 = vmatpush1.bf16.msra.mxu0 %v101
    %126 = vmatprep.subr.bf16.mxu0 0
    %127 = vmatpush1.bf16.msra.mxu0 0
    %128 = vmatprep.subr.bf16.mxu0 0
    %129 = vmatpush1.bf16.msra.mxu0 0
    %130 = vmatprep.subr.bf16.mxu0 0
    %131 = vmatpush1.bf16.msra.mxu0 0
    %132 = vmatprep.subr.bf16.mxu0 0
    %133 = vmatpush1.bf16.msra.mxu0 0
    %134 = vmatprep.subr.bf16.mxu0 0
    %135 = vmatpush1.bf16.msra.mxu0 0
    %136 = vmatprep.subr.bf16.mxu0 0
    %137 = vmatpush1.bf16.msra.mxu0 0
    %138 = vmatprep.subr.bf16.mxu0 0
    %139 = vmatpush1.bf16.msra.mxu0 0
    %140 = vmatprep.subr.bf16.mxu0 0
    %141 = vmatpush1.bf16.msra.mxu0 0
    %142 = vmatprep.mubr.bf16.mxu0 0
    %143 = vmatmul.mubr.bf16.gmra.mrb[0].mxu0 %v60
    %v144 = vpop.f32.mrb[0].mxu0
    %v145 = vadd.f32 0.0, %v144
    %v146 = vpop.f32.mrb[0].mxu0
    %v147 = vpop.f32.mrb[0].mxu0
    %v148 = vadd.f32 0.0, %v147
    %v149 = vpop.f32.mrb[0].mxu0
    %150 = vdwg.mxu0
    %v151 = vadd.f32 %v36, %v145
    %v152 = vadd.f32 %v37, %v148
    %153 = vst [vmem:[#allocation2] sm:$0xff] %v151
    %154 = vst [vmem:[#allocation2 + $0x8] sm:$0xff] %v152
    // Predicated region
    $region22: #{_forget_gate_rows_impl.1} parent=1 // pred_check
      %p155 = pneg %p30
    $region23: #{_forget_gate_rows_impl.1} parent=1 // pred_check_branch
      %157 = sbr.rel (%p155) target = $region25
    $region24: #{_forget_gate_rows_impl.1} parent=1 // pred_region
      %v158 = vld [vmem:[#allocation2] sm:$0xff]
      %v159 = vld [vmem:[#allocation2 + $0x8] sm:$0xff]
      %v160 = vld [vmem:[%s2] sm:$0x1]
      %v162 = vlaneseq
      %v163 = vshrl.u32 %v162, 7
      %v164 = vsub.s32 0, %v163
      %v165 = vrot.slane %v160, %v164
      %v167 = vadd.f32 %v158, %v165
      %v168 = vadd.f32 %v159, %v165
      %v169 = vsub.f32 0.0, %v167
      %v170 = vsub.f32 0.0, %v168
      %v171 = vmul.f32 %v169, 1.442695
      %v172 = vpow.pop %v171
      %v173 = vmul.f32 %v170, 1.442695
      %v174 = vpow.pop %v173
      %v175 = vadd.f32 %v172, 1.0
      %v176 = vadd.f32 %v174, 1.0
      %v177 = vrcp.pop %v175
      %v178 = vrcp.pop %v176
      %179 = vst [vmem:[#allocation6] sm:$0xff] %v177
      %180 = vst [vmem:[#allocation6 + $0x8] sm:$0xff] %v178
    $region25: #{_forget_gate_rows_impl.1} parent=1 // pred_fallthru
      _
    // Predicated region
    $region26: #{_forget_gate_rows_impl.1} parent=1 // pred_check
      _
    $region27: #{_forget_gate_rows_impl.1} parent=1 // pred_check_branch
      %182 = sbr.rel (0) target = $region29
    $region28: #{_forget_gate_rows_impl.1} parent=1 // pred_region
      %s184 = ssub.s32 256, 256
      %185 = vsyncadd [#allocation5], %s184
      %s186 = sshll.u32 [#allocation6], 4
      %s187 = int_to_ptr.vmem [resolvable:$true] %s186
      %192 = dma.vmem_to_hbm [thread:$0]  %s187, 256, %s3, [#allocation5], 128, 128, 8
    $region29: #{_forget_gate_rows_impl.1} parent=1 // pred_fallthru
      _
    // Predicated region
    $region30: #{_forget_gate_rows_impl.1} parent=1 // pred_check
      _
    $region31: #{_forget_gate_rows_impl.1} parent=1 // pred_check_branch
      %194 = sbr.rel (0) target = $region33
    $region32: #{_forget_gate_rows_impl.1} parent=1 // pred_region
      %195 = dma.done [#allocation5], 256
    $region33: #{_forget_gate_rows_impl.1} parent=1 // pred_fallthru
      _
    %196 = vsyncpa [#allocation4], 1
    %197 = vsyncpa [#allocation5], 1

</llo_original>
